<compile_context>
chip_gen: v6e
topology: v6e:2x2x1
jax: 0.10.0
libtpu: 0.0.40
codegen_flags: <defaults>
</compile_context>

<pallas_src>
import jax
import jax.numpy as jnp
from jax import lax
from jax.experimental import pallas as pl
from jax.experimental.pallas import tpu as pltpu

V_TH = 1.0
_LANE = 128


# --------------------------------------------------------------------------
# Kernel
# --------------------------------------------------------------------------
def _tandem_if_kernel(x_ref, s_ref, v_ref):
    """One (tile_t, tile_rows, 128) time-chunk of the IF recurrence.

    x_ref / s_ref : (tile_t, tile_rows, 128) VMEM tiles
    v_ref         : (tile_rows, 128) f32 VMEM scratch; persists across the
                    sequential time-chunk grid axis (grid axis 1).
    """
    # Reset the membrane potential at the first time chunk of each row tile.
    @pl.when(pl.program_id(1) == 0)
    def _():
        v_ref[...] = jnp.zeros_like(v_ref)

    tile_t = x_ref.shape[0]

    def step(t, v):
        v = v + x_ref[t].astype(jnp.float32)
        spike = v >= V_TH
        s_ref[t] = spike.astype(s_ref.dtype)
        return jnp.where(spike, v - V_TH, v)

    # fori_loop (unrolled) keeps the carried v's live range bounded while
    # staying visible to the LLO scheduler; the scratch is read once and
    # written once per chunk.
    v_ref[...] = lax.fori_loop(0, tile_t, step, v_ref[...], unroll=True)


# --------------------------------------------------------------------------
# Layout / sizing helpers
# --------------------------------------------------------------------------
def _largest_divisor_leq(n, cap):
    cap = max(1, min(n, cap))
    for d in range(cap, 0, -1):
        if n % d == 0:
            return d
    return 1


def _tpu_hints():
    """(vmem_capacity_bytes, has_two_tensorcores) with safe fallbacks."""
    vmem_cap = 128 * 1024 * 1024
    try:
        vmem_cap = int(pltpu.get_tpu_info().vmem_capacity_bytes)
    except Exception:
        pass
    try:
        kind = jax.devices()[0].device_kind.lower()
        two_tc = "v7" in kind
    except Exception:
        two_tc = vmem_cap <= 96 * 1024 * 1024  # v7x: 64 MiB VMEM per TC
    return vmem_cap, two_tc


def _choose_tile_rows(rows, tile_t, itemsize, target_bytes, prefer_multi):
    """Largest legal divisor of `rows` whose block fits `target_bytes`.

    Legal = multiple of 8 (sublane tiling) or the full `rows` extent
    (full-dim blocks are exempt from the (8, 128) rule)."""
    cap_rows = max(1, target_bytes // max(1, tile_t * _LANE * itemsize))
    cands = [d for d in range(8, rows + 1, 8) if rows % d == 0]
    if rows not in cands:
        cands.append(rows)
    fitting = [d for d in cands if d <= cap_rows]
    if not fitting:
        return min(cands)  # smallest legal block, even if over budget
    if prefer_multi:  # keep >=2 row tiles so both v7x TensorCores get work
        multi = [d for d in fitting if rows // d >= 2]
        if multi:
            return max(multi)
    return max(fitting)


# --------------------------------------------------------------------------
# Wrapper
# --------------------------------------------------------------------------
def tandem_if(x_seq, *, tile_t_max=32):
    """Integrate-and-fire over the leading (time) axis of x_seq."""
    orig_shape = x_seq.shape
    orig_dtype = x_seq.dtype
    T = int(orig_shape[0])
    M = 1
    for d in orig_shape[1:]:
        M *= int(d)
    itemsize = jnp.dtype(orig_dtype).itemsize

    vmem_cap, two_tc = _tpu_hints()
    target_bytes = min(8 << 20, vmem_cap // 8)  # ~8 MiB blocks, capped by VMEM

    # ---- time chunking: use a divisor of T -> never pad/slice the time axis.
    tile_t = _largest_divisor_leq(T, tile_t_max)

    # ---- fold the feature plane into a lane-dense (rows, 128) slab; pad only
    #      when M is not a multiple of 128 (pad + slice cost an extra HBM pass).
    m_pad = -(-M // _LANE) * _LANE
    rows = m_pad // _LANE

    tile_rows = _choose_tile_rows(rows, tile_t, itemsize, target_bytes, two_tc)

    x = x_seq.reshape(T, M)
    if m_pad != M:
        # Zero padding is semantically inert (padded lanes never reach v_th,
        # spikes = 0) and the padded columns are sliced off below.
        x = jnp.pad(x, ((0, 0), (0, m_pad - M)))
    x = x.reshape(T, rows, _LANE)

    grid = (rows // tile_rows, T // tile_t)
    block = (tile_t, tile_rows, _LANE)

    # VMEM budget: 2x double-buffered input + 2x output blocks + f32 scratch.
    block_bytes = tile_t * tile_rows * _LANE * itemsize
    scratch_bytes = tile_rows * _LANE * 4
    vmem_need = 4 * block_bytes + scratch_bytes
    vmem_limit = max(int(vmem_need * 1.3) + (2 << 20), 16 << 20)
    vmem_limit = min(vmem_limit, 48 << 20, vmem_cap * 3 // 4)

    s = pl.pallas_call(
        _tandem_if_kernel,
        out_shape=jax.ShapeDtypeStruct((T, rows, _LANE), orig_dtype),
        grid_spec=pltpu.PrefetchScalarGridSpec(
            num_scalar_prefetch=0,
            grid=grid,
            in_specs=[pl.BlockSpec(block, lambda i, t: (t, i, 0))],
            out_specs=pl.BlockSpec(block, lambda i, t: (t, i, 0)),
            scratch_shapes=[pltpu.VMEM((tile_rows, _LANE), jnp.float32)],
        ),
        compiler_params=pltpu.CompilerParams(
            dimension_semantics=("parallel", "arbitrary"),
            vmem_limit_bytes=int(vmem_limit),
        ),
    )(x)

    if m_pad != M:
        s = s.reshape(T, m_pad)[:, :M]
    return s.reshape(orig_shape)


# --------------------------------------------------------------------------
# Pure-JAX reference (mirrors the PyTorch loop)
# --------------------------------------------------------------------------
def tandem_if_ref(x_seq):
    def step(v, x_t):
        v = v + x_t
        s = (v >= V_TH).astype(x_seq.dtype)
        v = v - s * V_TH
        return v, s

    v0 = jnp.zeros(x_seq.shape[1:], dtype=x_seq.dtype)
    _, s_seq = lax.scan(step, v0, x_seq)
    return s_seq


if __name__ == "__main__":
    key = jax.random.PRNGKey(0)

    # Case 1: seq=8, batch=4, hidden=256 — lane-aligned, zero-copy path.
    T, B, N = 8, 4, 256
    x1 = jax.random.normal(key, (T, B, N), dtype=jnp.float32)
    s1 = tandem_if(x1)
    jax.block_until_ready(s1)
    assert s1.shape == x1.shape and s1.dtype == x1.dtype
    assert bool(jnp.allclose(s1, tandem_if_ref(x1))), "case 1 mismatch vs reference"

    # Case 2: odd shapes — exercises the feature-padding fallback and a
    # non-power-of-2 time tile (tile_t = 5, no time padding).
    T2, B2, N2 = 5, 3, 37
    x2 = jax.random.normal(jax.random.PRNGKey(1), (T2, B2, N2), dtype=jnp.float32)
    s2 = tandem_if(x2)
    jax.block_until_ready(s2)
    assert s2.shape == x2.shape and s2.dtype == x2.dtype
    assert bool(jnp.allclose(s2, tandem_if_ref(x2))), "case 2 mismatch vs reference"

    print("KERNEL_OK")
</pallas_src>

<mosaic_0001>
module attributes {stable_mosaic.version = 11 : i64} {
  func.func @_tandem_if_kernel(%arg0: i32, %arg1: i32, %arg2: memref<8x8x128xf32, #tpu.memory_space<vmem>>, %arg3: memref<8x8x128xf32, #tpu.memory_space<vmem>>, %arg4: memref<8x128xf32, #tpu.memory_space<vmem>>) attributes {dimension_semantics = [#tpu.dimension_semantics<parallel>, #tpu.dimension_semantics<arbitrary>], iteration_bounds = array<i64: 1, 1>, scalar_prefetch = 0 : i64, scratch_operands = 1 : i64, tpu.core_type = #tpu.core_type<tc>, window_params = [{transform_indices = @transform_0, window_bounds = array<i64: 8, 8, 128>}, {transform_indices = @transform_1, window_bounds = array<i64: 8, 8, 128>}]} {
    %c0_i32 = arith.constant 0 : i32
    %0 = arith.cmpi eq, %arg1, %c0_i32 : i32
    %1 = arith.extui %0 : i1 to i32
    %c0_i32_0 = arith.constant 0 : i32
    %2 = arith.cmpi ne, %1, %c0_i32_0 : i32
    scf.if %2 {
      %cst_52 = arith.constant 0.000000e+00 : f32
      %125 = vector.broadcast %cst_52 : f32 to vector<8x128xf32>
      %c0_53 = arith.constant 0 : index
      %c0_54 = arith.constant 0 : index
      %126 = vector.load %arg4[%c0_53, %c0_54] : memref<8x128xf32, #tpu.memory_space<vmem>>, vector<8x128xf32>
      tpu.vector_store %arg4[%c0_53, %c0_54], %125 {strides = array<i32>} : memref<8x128xf32, #tpu.memory_space<vmem>>, vector<8x128xf32>,
    } else {
    }
    %c0 = arith.constant 0 : index
    %c0_1 = arith.constant 0 : index
    %3 = vector.load %arg4[%c0, %c0_1] : memref<8x128xf32, #tpu.memory_space<vmem>>, vector<8x128xf32>
    %c0_i32_2 = arith.constant 0 : i32
    %4 = arith.index_cast %c0_i32_2 : i32 to index
    %c0_3 = arith.constant 0 : index
    %c0_4 = arith.constant 0 : index
    %5 = vector.load %arg2[%4, %c0_3, %c0_4] : memref<8x8x128xf32, #tpu.memory_space<vmem>>, vector<1x8x128xf32>
    %6 = vector.shape_cast %5 : vector<1x8x128xf32> to vector<8x128xf32>
    %7 = arith.addf %3, %6 : vector<8x128xf32>
    %cst = arith.constant 1.000000e+00 : f32
    %8 = vector.broadcast %cst : f32 to vector<8x128xf32>
    %9 = arith.cmpf oge, %7, %8 : vector<8x128xf32>
    %10 = arith.extui %9 : vector<8x128xi1> to vector<8x128xi32>
    %11 = arith.sitofp %10 : vector<8x128xi32> to vector<8x128xf32>
    %12 = arith.index_cast %c0_i32_2 : i32 to index
    %c0_5 = arith.constant 0 : index
    %c0_6 = arith.constant 0 : index
    %13 = vector.load %arg3[%12, %c0_5, %c0_6] : memref<8x8x128xf32, #tpu.memory_space<vmem>>, vector<1x8x128xf32>
    %14 = vector.shape_cast %13 : vector<1x8x128xf32> to vector<8x128xf32>
    %15 = vector.shape_cast %11 : vector<8x128xf32> to vector<1x8x128xf32>
    tpu.vector_store %arg3[%12, %c0_5, %c0_6], %15 {strides = array<i32>} : memref<8x8x128xf32, #tpu.memory_space<vmem>>, vector<1x8x128xf32>,
    %cst_7 = arith.constant 1.000000e+00 : f32
    %16 = vector.broadcast %cst_7 : f32 to vector<8x128xf32>
    %17 = arith.subf %7, %16 : vector<8x128xf32>
    %18 = arith.select %9, %17, %7 : vector<8x128xi1>, vector<8x128xf32>
    %c1_i32 = arith.constant 1 : i32
    %19 = arith.index_cast %c1_i32 : i32 to index
    %c0_8 = arith.constant 0 : index
    %c0_9 = arith.constant 0 : index
    %20 = vector.load %arg2[%19, %c0_8, %c0_9] : memref<8x8x128xf32, #tpu.memory_space<vmem>>, vector<1x8x128xf32>
    %21 = vector.shape_cast %20 : vector<1x8x128xf32> to vector<8x128xf32>
    %22 = arith.addf %18, %21 : vector<8x128xf32>
    %cst_10 = arith.constant 1.000000e+00 : f32
    %23 = vector.broadcast %cst_10 : f32 to vector<8x128xf32>
    %24 = arith.cmpf oge, %22, %23 : vector<8x128xf32>
    %25 = arith.extui %24 : vector<8x128xi1> to vector<8x128xi32>
    %26 = arith.sitofp %25 : vector<8x128xi32> to vector<8x128xf32>
    %27 = arith.index_cast %c1_i32 : i32 to index
    %c0_11 = arith.constant 0 : index
    %c0_12 = arith.constant 0 : index
    %28 = vector.load %arg3[%27, %c0_11, %c0_12] : memref<8x8x128xf32, #tpu.memory_space<vmem>>, vector<1x8x128xf32>
    %29 = vector.shape_cast %28 : vector<1x8x128xf32> to vector<8x128xf32>
    %30 = vector.shape_cast %26 : vector<8x128xf32> to vector<1x8x128xf32>
    tpu.vector_store %arg3[%27, %c0_11, %c0_12], %30 {strides = array<i32>} : memref<8x8x128xf32, #tpu.memory_space<vmem>>, vector<1x8x128xf32>,
    %cst_13 = arith.constant 1.000000e+00 : f32
    %31 = vector.broadcast %cst_13 : f32 to vector<8x128xf32>
    %32 = arith.subf %22, %31 : vector<8x128xf32>
    %33 = arith.select %24, %32, %22 : vector<8x128xi1>, vector<8x128xf32>
    %c2_i32 = arith.constant 2 : i32
    %34 = arith.index_cast %c2_i32 : i32 to index
    %c0_14 = arith.constant 0 : index
    %c0_15 = arith.constant 0 : index
    %35 = vector.load %arg2[%34, %c0_14, %c0_15] : memref<8x8x128xf32, #tpu.memory_space<vmem>>, vector<1x8x128xf32>
    %36 = vector.shape_cast %35 : vector<1x8x128xf32> to vector<8x128xf32>
    %37 = arith.addf %33, %36 : vector<8x128xf32>
    %cst_16 = arith.constant 1.000000e+00 : f32
    %38 = vector.broadcast %cst_16 : f32 to vector<8x128xf32>
    %39 = arith.cmpf oge, %37, %38 : vector<8x128xf32>
    %40 = arith.extui %39 : vector<8x128xi1> to vector<8x128xi32>
    %41 = arith.sitofp %40 : vector<8x128xi32> to vector<8x128xf32>
    %42 = arith.index_cast %c2_i32 : i32 to index
    %c0_17 = arith.constant 0 : index
    %c0_18 = arith.constant 0 : index
    %43 = vector.load %arg3[%42, %c0_17, %c0_18] : memref<8x8x128xf32, #tpu.memory_space<vmem>>, vector<1x8x128xf32>
    %44 = vector.shape_cast %43 : vector<1x8x128xf32> to vector<8x128xf32>
    %45 = vector.shape_cast %41 : vector<8x128xf32> to vector<1x8x128xf32>
    tpu.vector_store %arg3[%42, %c0_17, %c0_18], %45 {strides = array<i32>} : memref<8x8x128xf32, #tpu.memory_space<vmem>>, vector<1x8x128xf32>,
    %cst_19 = arith.constant 1.000000e+00 : f32
    %46 = vector.broadcast %cst_19 : f32 to vector<8x128xf32>
    %47 = arith.subf %37, %46 : vector<8x128xf32>
    %48 = arith.select %39, %47, %37 : vector<8x128xi1>, vector<8x128xf32>
    %c3_i32 = arith.constant 3 : i32
    %49 = arith.index_cast %c3_i32 : i32 to index
    %c0_20 = arith.constant 0 : index
    %c0_21 = arith.constant 0 : index
    %50 = vector.load %arg2[%49, %c0_20, %c0_21] : memref<8x8x128xf32, #tpu.memory_space<vmem>>, vector<1x8x128xf32>
    %51 = vector.shape_cast %50 : vector<1x8x128xf32> to vector<8x128xf32>
    %52 = arith.addf %48, %51 : vector<8x128xf32>
    %cst_22 = arith.constant 1.000000e+00 : f32
    %53 = vector.broadcast %cst_22 : f32 to vector<8x128xf32>
    %54 = arith.cmpf oge, %52, %53 : vector<8x128xf32>
    %55 = arith.extui %54 : vector<8x128xi1> to vector<8x128xi32>
    %56 = arith.sitofp %55 : vector<8x128xi32> to vector<8x128xf32>
    %57 = arith.index_cast %c3_i32 : i32 to index
    %c0_23 = arith.constant 0 : index
    %c0_24 = arith.constant 0 : index
    %58 = vector.load %arg3[%57, %c0_23, %c0_24] : memref<8x8x128xf32, #tpu.memory_space<vmem>>, vector<1x8x128xf32>
    %59 = vector.shape_cast %58 : vector<1x8x128xf32> to vector<8x128xf32>
    %60 = vector.shape_cast %56 : vector<8x128xf32> to vector<1x8x128xf32>
    tpu.vector_store %arg3[%57, %c0_23, %c0_24], %60 {strides = array<i32>} : memref<8x8x128xf32, #tpu.memory_space<vmem>>, vector<1x8x128xf32>,
    %cst_25 = arith.constant 1.000000e+00 : f32
    %61 = vector.broadcast %cst_25 : f32 to vector<8x128xf32>
    %62 = arith.subf %52, %61 : vector<8x128xf32>
    %63 = arith.select %54, %62, %52 : vector<8x128xi1>, vector<8x128xf32>
    %c4_i32 = arith.constant 4 : i32
    %64 = arith.index_cast %c4_i32 : i32 to index
    %c0_26 = arith.constant 0 : index
    %c0_27 = arith.constant 0 : index
    %65 = vector.load %arg2[%64, %c0_26, %c0_27] : memref<8x8x128xf32, #tpu.memory_space<vmem>>, vector<1x8x128xf32>
    %66 = vector.shape_cast %65 : vector<1x8x128xf32> to vector<8x128xf32>
    %67 = arith.addf %63, %66 : vector<8x128xf32>
    %cst_28 = arith.constant 1.000000e+00 : f32
    %68 = vector.broadcast %cst_28 : f32 to vector<8x128xf32>
    %69 = arith.cmpf oge, %67, %68 : vector<8x128xf32>
    %70 = arith.extui %69 : vector<8x128xi1> to vector<8x128xi32>
    %71 = arith.sitofp %70 : vector<8x128xi32> to vector<8x128xf32>
    %72 = arith.index_cast %c4_i32 : i32 to index
    %c0_29 = arith.constant 0 : index
    %c0_30 = arith.constant 0 : index
    %73 = vector.load %arg3[%72, %c0_29, %c0_30] : memref<8x8x128xf32, #tpu.memory_space<vmem>>, vector<1x8x128xf32>
    %74 = vector.shape_cast %73 : vector<1x8x128xf32> to vector<8x128xf32>
    %75 = vector.shape_cast %71 : vector<8x128xf32> to vector<1x8x128xf32>
    tpu.vector_store %arg3[%72, %c0_29, %c0_30], %75 {strides = array<i32>} : memref<8x8x128xf32, #tpu.memory_space<vmem>>, vector<1x8x128xf32>,
    %cst_31 = arith.constant 1.000000e+00 : f32
    %76 = vector.broadcast %cst_31 : f32 to vector<8x128xf32>
    %77 = arith.subf %67, %76 : vector<8x128xf32>
    %78 = arith.select %69, %77, %67 : vector<8x128xi1>, vector<8x128xf32>
    %c5_i32 = arith.constant 5 : i32
    %79 = arith.index_cast %c5_i32 : i32 to index
    %c0_32 = arith.constant 0 : index
    %c0_33 = arith.constant 0 : index
    %80 = vector.load %arg2[%79, %c0_32, %c0_33] : memref<8x8x128xf32, #tpu.memory_space<vmem>>, vector<1x8x128xf32>
    %81 = vector.shape_cast %80 : vector<1x8x128xf32> to vector<8x128xf32>
    %82 = arith.addf %78, %81 : vector<8x128xf32>
    %cst_34 = arith.constant 1.000000e+00 : f32
    %83 = vector.broadcast %cst_34 : f32 to vector<8x128xf32>
    %84 = arith.cmpf oge, %82, %83 : vector<8x128xf32>
    %85 = arith.extui %84 : vector<8x128xi1> to vector<8x128xi32>
    %86 = arith.sitofp %85 : vector<8x128xi32> to vector<8x128xf32>
    %87 = arith.index_cast %c5_i32 : i32 to index
    %c0_35 = arith.constant 0 : index
    %c0_36 = arith.constant 0 : index
    %88 = vector.load %arg3[%87, %c0_35, %c0_36] : memref<8x8x128xf32, #tpu.memory_space<vmem>>, vector<1x8x128xf32>
    %89 = vector.shape_cast %88 : vector<1x8x128xf32> to vector<8x128xf32>
    %90 = vector.shape_cast %86 : vector<8x128xf32> to vector<1x8x128xf32>
    tpu.vector_store %arg3[%87, %c0_35, %c0_36], %90 {strides = array<i32>} : memref<8x8x128xf32, #tpu.memory_space<vmem>>, vector<1x8x128xf32>,
    %cst_37 = arith.constant 1.000000e+00 : f32
    %91 = vector.broadcast %cst_37 : f32 to vector<8x128xf32>
    %92 = arith.subf %82, %91 : vector<8x128xf32>
    %93 = arith.select %84, %92, %82 : vector<8x128xi1>, vector<8x128xf32>
    %c6_i32 = arith.constant 6 : i32
    %94 = arith.index_cast %c6_i32 : i32 to index
    %c0_38 = arith.constant 0 : index
    %c0_39 = arith.constant 0 : index
    %95 = vector.load %arg2[%94, %c0_38, %c0_39] : memref<8x8x128xf32, #tpu.memory_space<vmem>>, vector<1x8x128xf32>
    %96 = vector.shape_cast %95 : vector<1x8x128xf32> to vector<8x128xf32>
    %97 = arith.addf %93, %96 : vector<8x128xf32>
    %cst_40 = arith.constant 1.000000e+00 : f32
    %98 = vector.broadcast %cst_40 : f32 to vector<8x128xf32>
    %99 = arith.cmpf oge, %97, %98 : vector<8x128xf32>
    %100 = arith.extui %99 : vector<8x128xi1> to vector<8x128xi32>
    %101 = arith.sitofp %100 : vector<8x128xi32> to vector<8x128xf32>
    %102 = arith.index_cast %c6_i32 : i32 to index
    %c0_41 = arith.constant 0 : index
    %c0_42 = arith.constant 0 : index
    %103 = vector.load %arg3[%102, %c0_41, %c0_42] : memref<8x8x128xf32, #tpu.memory_space<vmem>>, vector<1x8x128xf32>
    %104 = vector.shape_cast %103 : vector<1x8x128xf32> to vector<8x128xf32>
    %105 = vector.shape_cast %101 : vector<8x128xf32> to vector<1x8x128xf32>
    tpu.vector_store %arg3[%102, %c0_41, %c0_42], %105 {strides = array<i32>} : memref<8x8x128xf32, #tpu.memory_space<vmem>>, vector<1x8x128xf32>,
    %cst_43 = arith.constant 1.000000e+00 : f32
    %106 = vector.broadcast %cst_43 : f32 to vector<8x128xf32>
    %107 = arith.subf %97, %106 : vector<8x128xf32>
    %108 = arith.select %99, %107, %97 : vector<8x128xi1>, vector<8x128xf32>
    %c7_i32 = arith.constant 7 : i32
    %109 = arith.index_cast %c7_i32 : i32 to index
    %c0_44 = arith.constant 0 : index
    %c0_45 = arith.constant 0 : index
    %110 = vector.load %arg2[%109, %c0_44, %c0_45] : memref<8x8x128xf32, #tpu.memory_space<vmem>>, vector<1x8x128xf32>
    %111 = vector.shape_cast %110 : vector<1x8x128xf32> to vector<8x128xf32>
    %112 = arith.addf %108, %111 : vector<8x128xf32>
    %cst_46 = arith.constant 1.000000e+00 : f32
    %113 = vector.broadcast %cst_46 : f32 to vector<8x128xf32>
    %114 = arith.cmpf oge, %112, %113 : vector<8x128xf32>
    %115 = arith.extui %114 : vector<8x128xi1> to vector<8x128xi32>
    %116 = arith.sitofp %115 : vector<8x128xi32> to vector<8x128xf32>
    %117 = arith.index_cast %c7_i32 : i32 to index
    %c0_47 = arith.constant 0 : index
    %c0_48 = arith.constant 0 : index
    %118 = vector.load %arg3[%117, %c0_47, %c0_48] : memref<8x8x128xf32, #tpu.memory_space<vmem>>, vector<1x8x128xf32>
    %119 = vector.shape_cast %118 : vector<1x8x128xf32> to vector<8x128xf32>
    %120 = vector.shape_cast %116 : vector<8x128xf32> to vector<1x8x128xf32>
    tpu.vector_store %arg3[%117, %c0_47, %c0_48], %120 {strides = array<i32>} : memref<8x8x128xf32, #tpu.memory_space<vmem>>, vector<1x8x128xf32>,
    %cst_49 = arith.constant 1.000000e+00 : f32
    %121 = vector.broadcast %cst_49 : f32 to vector<8x128xf32>
    %122 = arith.subf %112, %121 : vector<8x128xf32>
    %123 = arith.select %114, %122, %112 : vector<8x128xi1>, vector<8x128xf32>
    %c8_i32 = arith.constant 8 : i32
    %c0_50 = arith.constant 0 : index
    %c0_51 = arith.constant 0 : index
    %124 = vector.load %arg4[%c0_50, %c0_51] : memref<8x128xf32, #tpu.memory_space<vmem>>, vector<8x128xf32>
    tpu.vector_store %arg4[%c0_50, %c0_51], %123 {strides = array<i32>} : memref<8x128xf32, #tpu.memory_space<vmem>>, vector<8x128xf32>,
    return
  }
  func.func @transform_0(%arg0: i32, %arg1: i32) -> (i32, i32, i32) {
    %c0_i32 = arith.constant 0 : i32
    %c0_i32_0 = arith.constant 0 : i32
    return %arg1, %arg0, %c0_i32 : i32, i32, i32
  }
  func.func @transform_1(%arg0: i32, %arg1: i32) -> (i32, i32, i32) {
    %c0_i32 = arith.constant 0 : i32
    %c0_i32_0 = arith.constant 0 : i32
    return %arg1, %arg0, %c0_i32 : i32, i32, i32
  }
}

</mosaic_0001>

<llo_original>
// kernel: tpu_custom_call.1
$region0: #{tpu_custom_call.1}
  #allocation0 [shape = 'u32[]', space=smem, size = 0x4, offset = 0x4, fixed_abs, tag = 'smem constant byte address 0x4 - core index']
  #allocation1 [shape = 'u32[144,128]{1,0:T(1,128)}', space=vmem, size = 0x12000, scoped, tag = 'internal scratch']
  #allocation2 [shape = 'f32[8,128]{1,0:T(8,128)}', space=vmem, size = 0x1000, scoped, tag = 'scratch operand']
  %s0 = inlined_call_operand.hbm [shape: f32[8,8,128], index: 0, kind: input, shape index: {}]
  %s1 = inlined_call_operand.hbm [shape: f32[8,8,128], index: 1, kind: output, shape index: {}]
  %s2 = sld [smem:[#allocation0]]
  $region22: #{tpu_custom_call.1} parent=0
    _
  %s4 = ssub.s32 1, %s2
  %s5 = scalar_select 0, %s4, %s2
  $region1: #{tpu_custom_call.1} parent=0
    #allocation3 [shape = 'u8[32768]{0}', space=vmem, size = 0x8000, scoped, tag = 'input window, operand 0, single buffered']
    #allocation4 [shape = 's32[1]{0}', space=sflag, size = 0x4, scoped, tag = 'scoped memory for tpu_custom_call.1']
    #allocation5 [shape = 's32[1]{0}', space=sflag, size = 0x4, scoped, tag = 'scoped memory for tpu_custom_call.1']
    #allocation6 [shape = 'u8[32768]{0}', space=vmem, size = 0x8000, scoped, tag = 'output window, operand 0, single buffered']
    %6 = vsyncpa [#allocation4], 0
    %7 = vsyncpa [#allocation5], 0
    // Predicated region
    $region2: #{tpu_custom_call.1} parent=1 // pred_check
      _
    $region3: #{tpu_custom_call.1} parent=1 // pred_check_branch
      %9 = sbr.rel (0) target = $region5
    $region4: #{tpu_custom_call.1} parent=1 // pred_region
      %s11 = ssub.s32 1024, 1024
      %12 = vsyncadd [#allocation4], %s11
      %s13 = sshll.u32 [#allocation3], 4
      %s14 = int_to_ptr.vmem [resolvable:$true] %s13
      %19 = dma.hbm_to_vmem [thread:$0]  %s0, 1024, %s14, [#allocation4], 128, 128, 8
    $region5: #{tpu_custom_call.1} parent=1 // pred_fallthru
      _
    // Predicated region
    $region6: #{tpu_custom_call.1} parent=1 // pred_check
      _
    $region7: #{tpu_custom_call.1} parent=1 // pred_check_branch
      %21 = sbr.rel (0) target = $region9
    $region8: #{tpu_custom_call.1} parent=1 // pred_region
      %22 = dma.done [#allocation4], 1024
    $region9: #{tpu_custom_call.1} parent=1 // pred_fallthru
      _
    %p23 = scmp.eq.s32.totalorder 0, 0
    // Predicated region
    $region10: #{tpu_custom_call.1} parent=1 // pred_check
      %p24 = pneg %p23
    $region11: #{tpu_custom_call.1} parent=1 // pred_check_branch
      %26 = sbr.rel (%p24) target = $region13
    $region12: #{tpu_custom_call.1} parent=1 // pred_region
      %27 = vst [vmem:[#allocation2] sm:$0xff] 0.0
    $region13: #{tpu_custom_call.1} parent=1 // pred_fallthru
      _
    %v28 = vld [vmem:[#allocation2] sm:$0xff]
    %v29 = vld [vmem:[#allocation3] sm:$0xff]
    %v30 = vadd.f32 %v28, %v29
    %vm31 = vcmp.ge.f32.partialorder %v30, 1.0
    %v32 = vsel %vm31, 1, 0
    %v33 = vcvt.s32.f32 %v32
    %34 = vst [vmem:[#allocation6] sm:$0xff] %v33
    %v35 = vsub.f32 %v30, 1.0
    %v36 = vsel %vm31, %v35, %v30
    %s37 = scalar_lea.vmem [#allocation3], 8
    %v38 = vld [vmem:[%s37] sm:$0xff]
    %v39 = vadd.f32 %v36, %v38
    %vm40 = vcmp.ge.f32.partialorder %v39, 1.0
    %v41 = vsel %vm40, 1, 0
    %v42 = vcvt.s32.f32 %v41
    %s43 = scalar_lea.vmem [#allocation6], 8
    %44 = vst [vmem:[%s43] sm:$0xff] %v42
    %v45 = vsub.f32 %v39, 1.0
    %v46 = vsel %vm40, %v45, %v39
    %s47 = scalar_lea.vmem [#allocation3], 16
    %v48 = vld [vmem:[%s47] sm:$0xff]
    %v49 = vadd.f32 %v46, %v48
    %vm50 = vcmp.ge.f32.partialorder %v49, 1.0
    %v51 = vsel %vm50, 1, 0
    %v52 = vcvt.s32.f32 %v51
    %s53 = scalar_lea.vmem [#allocation6], 16
    %54 = vst [vmem:[%s53] sm:$0xff] %v52
    %v55 = vsub.f32 %v49, 1.0
    %v56 = vsel %vm50, %v55, %v49
    %s57 = scalar_lea.vmem [#allocation3], 24
    %v58 = vld [vmem:[%s57] sm:$0xff]
    %v59 = vadd.f32 %v56, %v58
    %vm60 = vcmp.ge.f32.partialorder %v59, 1.0
    %v61 = vsel %vm60, 1, 0
    %v62 = vcvt.s32.f32 %v61
    %s63 = scalar_lea.vmem [#allocation6], 24
    %64 = vst [vmem:[%s63] sm:$0xff] %v62
    %v65 = vsub.f32 %v59, 1.0
    %v66 = vsel %vm60, %v65, %v59
    %s67 = scalar_lea.vmem [#allocation3], 32
    %v68 = vld [vmem:[%s67] sm:$0xff]
    %v69 = vadd.f32 %v66, %v68
    %vm70 = vcmp.ge.f32.partialorder %v69, 1.0
    %v71 = vsel %vm70, 1, 0
    %v72 = vcvt.s32.f32 %v71
    %s73 = scalar_lea.vmem [#allocation6], 32
    %74 = vst [vmem:[%s73] sm:$0xff] %v72
    %v75 = vsub.f32 %v69, 1.0
    %v76 = vsel %vm70, %v75, %v69
    %s77 = scalar_lea.vmem [#allocation3], 40
    %v78 = vld [vmem:[%s77] sm:$0xff]
    %v79 = vadd.f32 %v76, %v78
    %vm80 = vcmp.ge.f32.partialorder %v79, 1.0
    %v81 = vsel %vm80, 1, 0
    %v82 = vcvt.s32.f32 %v81
    %s83 = scalar_lea.vmem [#allocation6], 40
    %84 = vst [vmem:[%s83] sm:$0xff] %v82
    %v85 = vsub.f32 %v79, 1.0
    %v86 = vsel %vm80, %v85, %v79
    %s87 = scalar_lea.vmem [#allocation3], 48
    %v88 = vld [vmem:[%s87] sm:$0xff]
    %v89 = vadd.f32 %v86, %v88
    %vm90 = vcmp.ge.f32.partialorder %v89, 1.0
    %v91 = vsel %vm90, 1, 0
    %v92 = vcvt.s32.f32 %v91
    %s93 = scalar_lea.vmem [#allocation6], 48
    %94 = vst [vmem:[%s93] sm:$0xff] %v92
    %v95 = vsub.f32 %v89, 1.0
    %v96 = vsel %vm90, %v95, %v89
    %s97 = scalar_lea.vmem [#allocation3], 56
    %v98 = vld [vmem:[%s97] sm:$0xff]
    %v99 = vadd.f32 %v96, %v98
    %vm100 = vcmp.ge.f32.partialorder %v99, 1.0
    %v101 = vsel %vm100, 1, 0
    %v102 = vcvt.s32.f32 %v101
    %s103 = scalar_lea.vmem [#allocation6], 56
    %104 = vst [vmem:[%s103] sm:$0xff] %v102
    %v105 = vsub.f32 %v99, 1.0
    %v106 = vsel %vm100, %v105, %v99
    %107 = vst [vmem:[#allocation2] sm:$0xff] %v106
    // Predicated region
    $region14: #{tpu_custom_call.1} parent=1 // pred_check
      _
    $region15: #{tpu_custom_call.1} parent=1 // pred_check_branch
      %109 = sbr.rel (0) target = $region17
    $region16: #{tpu_custom_call.1} parent=1 // pred_region
      %s111 = ssub.s32 1024, 1024
      %112 = vsyncadd [#allocation5], %s111
      %s113 = sshll.u32 [#allocation6], 4
      %s114 = int_to_ptr.vmem [resolvable:$true] %s113
      %119 = dma.vmem_to_hbm [thread:$0]  %s114, 1024, %s1, [#allocation5], 128, 128, 8
    $region17: #{tpu_custom_call.1} parent=1 // pred_fallthru
      _
    // Predicated region
    $region18: #{tpu_custom_call.1} parent=1 // pred_check
      _
    $region19: #{tpu_custom_call.1} parent=1 // pred_check_branch
      %121 = sbr.rel (0) target = $region21
    $region20: #{tpu_custom_call.1} parent=1 // pred_region
      %122 = dma.done [#allocation5], 1024
    $region21: #{tpu_custom_call.1} parent=1 // pred_fallthru
      _
    %123 = vsyncpa [#allocation4], 1
    %124 = vsyncpa [#allocation5], 1

</llo_original>
